<compile_context>
chip_gen: v6e
topology: v6e:2x2x1
jax: 0.10.0
libtpu: 0.0.40
codegen_flags: <defaults>
</compile_context>

<pallas_src>
import functools

import jax
import jax.numpy as jnp
from jax import lax
from jax.experimental import pallas as pl
from jax.experimental.pallas import tpu as pltpu


def _round_up(x, m):
    return (x + m - 1) // m * m


def _choose_row_tile(H, W, target_lanes):
    """Largest TH that divides H, keeps TH*W a multiple of 128 lanes (or TH==H),
    and TH*W <= target_lanes; falls back to the smallest legal tile."""
    valid = [th for th in range(1, H + 1)
             if H % th == 0 and ((th * W) % 128 == 0 or th == H)]
    fitting = [th for th in valid if th * W <= target_lanes]
    if fitting:
        return max(fitting)
    return min(valid)


def _head_block_kernel(xm_ref, xu_ref, xd_ref, w3_ref, b3_ref, wfc_ref, bfc_ref,
                       o_ref, im2col_ref, *, TH, W, compute_dtype):
    # xm_ref : (1, Cin_p, TH*W)    main rows of the tile (channels on sublanes,
    #                              flattened spatial on lanes), compute dtype
    # xu_ref : (1, 1, Cin_p, W)    row above the tile (zeros for the first tile)
    # xd_ref : (1, 1, Cin_p, W)    row below the tile (zeros for the last tile)
    # w3_ref : (Chead, 9*Cin_p)    fused 3x3 weights, tap-major / channel-minor
    # b3_ref : (Chead, 1) f32
    # wfc_ref: (Cout, Chead)       1x1 conv weights
    # bfc_ref: (Cout, 1) f32
    # o_ref  : (1, Cout, TH*W)     lane-dense output tile
    # im2col_ref: (9*Cin_p, TH*W)  compute-dtype scratch feeding ONE MXU matmul
    TL = TH * W
    cin_p = xm_ref.shape[1]
    P = (TH + 2) * W

    # Haloed tile: [row above | TH rows | row below], already in compute dtype.
    s0 = jnp.concatenate([xu_ref[0, 0], xm_ref[0], xd_ref[0, 0]], axis=-1)  # (Cin_p, P)

    # Hoisted column-border handling: build the two +/-1-column shifted,
    # pre-masked copies ONCE (2 lane shifts + 2 masks) instead of masking
    # 6 of the 9 taps.  The flattened +/-1 shift wraps across row ends, so
    # lanes at column 0 / W-1 are zeroed (== the conv's zero padding).
    col = lax.broadcasted_iota(jnp.int32, (1, P), 1) % W
    mask_l = (col >= 1).astype(compute_dtype)        # column x-1 exists
    mask_r = (col <= W - 2).astype(compute_dtype)    # column x+1 exists
    zcol = jnp.zeros((cin_p, 1), compute_dtype)
    sm1 = jnp.concatenate([zcol, s0[:, :P - 1]], axis=-1) * mask_l   # value at (y, x-1)
    sp1 = jnp.concatenate([s0[:, 1:], zcol], axis=-1) * mask_r       # value at (y, x+1)

    # im2col: nine taps, tap-major / channel-minor along K, written straight
    # into the compute-dtype scratch (single store pass, no f32 temp, no
    # redundant astype).  All nine reads are aligned static slices.
    srcs = (sm1, s0, sp1)            # ox = -1, 0, +1  (matches kx = 0, 1, 2)
    for oy in (-1, 0, 1):
        base = (oy + 1) * W
        for xi in range(3):
            t = 3 * (oy + 1) + xi
            im2col_ref[t * cin_p:(t + 1) * cin_p, :] = srcs[xi][:, base:base + TL]

    # 3x3 conv == ONE matmul with K = 9*Cin_p (f32 accumulation), then fused
    # bias + ReLU + downcast feeding the 1x1 matmul.
    acc = jnp.dot(w3_ref[...], im2col_ref[...], preferred_element_type=jnp.float32)
    hid = jnp.maximum(acc + b3_ref[...], 0.0).astype(compute_dtype)

    out = jnp.dot(wfc_ref[...], hid, preferred_element_type=jnp.float32) + bfc_ref[...]
    o_ref[0] = out.astype(o_ref.dtype)               # lane-dense (Cout, TH*W) store


def head_block(x_nchw, w3, b3, wfc, bfc, *, compute_dtype=jnp.float32,
               target_tile_lanes=None):
    """CenterNet HeadBlock forward.

    x_nchw: (N, Cin, H, W).  Params in PyTorch layout:
      w3 (Chead, Cin, 3, 3), b3 (Chead,), wfc (Cout, Chead, 1, 1), bfc (Cout,).
    Returns (N, Cout, H, W).
    """
    N, Cin, H, W = x_nchw.shape
    Chead = w3.shape[0]
    Cout = wfc.shape[0]
    HW = H * W

    compute_dtype = jnp.dtype(compute_dtype)
    itemsize = compute_dtype.itemsize
    # Channel pad to the compute-dtype sublane tile (8 for f32, 16 for bf16).
    sub = max(8, 32 // itemsize)
    cin_p = _round_up(Cin, sub)

    # Row-tile size: lane-dense (multiple of 128 lanes unless whole image),
    # capped so the dominant (9*Cin_p, TH*W) im2col scratch stays ~<= 8 MiB
    # (comfortably inside the 32 MiB scoped VMEM default on every generation).
    if target_tile_lanes is None:
        budget = (8 * 1024 * 1024) // max(1, 9 * cin_p * itemsize)
        target_tile_lanes = max(128, min(4096, budget))
    TH = _choose_row_tile(H, W, target_tile_lanes)
    n_h = H // TH
    TL = TH * W

    # Activations: cast once to the compute dtype (halves HBM->VMEM DMA for
    # bf16), pad channels; NCHW -> (N, Cin_p, H*W) is a free reshape.
    xc = x_nchw.astype(compute_dtype)
    if cin_p != Cin:
        xc = jnp.pad(xc, ((0, 0), (0, cin_p - Cin), (0, 0), (0, 0)))
    x_flat = xc.reshape(N, cin_p, HW)

    # One halo row above/below per row-tile, gathered in the wrapper (only
    # ~2/TH of the activations) so every in-kernel block is a plain,
    # non-overlapping, auto-pipelined BlockSpec.
    zrow = jnp.zeros((N, 1, cin_p, W), compute_dtype)
    if n_h > 1:
        up = jnp.moveaxis(xc[:, :, TH - 1:H - 1:TH, :], 1, 2)   # (N, n_h-1, Cin_p, W)
        dn = jnp.moveaxis(xc[:, :, TH:H:TH, :], 1, 2)
        x_up = jnp.concatenate([zrow, up], axis=1)              # row r0-1 per tile
        x_dn = jnp.concatenate([dn, zrow], axis=1)              # row r0+TH per tile
    else:
        x_up = zrow
        x_dn = zrow

    # Fused 3x3 weights: (Chead, Cin, 3, 3) -> (Chead, 3, 3, Cin_p) -> (Chead, 9*Cin_p);
    # K ordering = tap-major / channel-minor, matching the kernel's im2col.
    w3t = jnp.transpose(w3, (0, 2, 3, 1))
    if cin_p != Cin:
        w3t = jnp.pad(w3t, ((0, 0), (0, 0), (0, 0), (0, cin_p - Cin)))
    w3k = w3t.reshape(Chead, 9 * cin_p).astype(compute_dtype)
    wfck = wfc.reshape(Cout, Chead).astype(compute_dtype)
    b3k = b3.reshape(Chead, 1).astype(jnp.float32)
    bfck = bfc.reshape(Cout, 1).astype(jnp.float32)

    kernel = functools.partial(_head_block_kernel, TH=TH, W=W,
                               compute_dtype=compute_dtype)

    flops = 2 * N * HW * (9 * Cin * Chead + Chead * Cout)
    bytes_accessed = int(x_flat.size * itemsize
                         + (x_up.size + x_dn.size) * itemsize
                         + (w3k.size + wfck.size) * itemsize
                         + N * Cout * HW * jnp.dtype(x_nchw.dtype).itemsize)

    out = pl.pallas_call(
        kernel,
        out_shape=jax.ShapeDtypeStruct((N, Cout, HW), x_nchw.dtype),
        grid=(N, n_h),
        in_specs=[
            pl.BlockSpec((1, cin_p, TL), lambda n, h: (n, 0, h)),
            pl.BlockSpec((1, 1, cin_p, W), lambda n, h: (n, h, 0, 0)),
            pl.BlockSpec((1, 1, cin_p, W), lambda n, h: (n, h, 0, 0)),
            pl.BlockSpec((Chead, 9 * cin_p), lambda n, h: (0, 0)),
            pl.BlockSpec((Chead, 1), lambda n, h: (0, 0)),
            pl.BlockSpec((Cout, Chead), lambda n, h: (0, 0)),
            pl.BlockSpec((Cout, 1), lambda n, h: (0, 0)),
        ],
        out_specs=pl.BlockSpec((1, Cout, TL), lambda n, h: (n, 0, h)),
        scratch_shapes=[pltpu.VMEM((9 * cin_p, TL), compute_dtype)],
        compiler_params=pltpu.CompilerParams(
            dimension_semantics=("parallel", "parallel")),
        cost_estimate=pl.CostEstimate(flops=flops, transcendentals=0,
                                      bytes_accessed=bytes_accessed),
    )(x_flat, x_up, x_dn, w3k, b3k, wfck, bfck)

    # Free reshape back to NCHW.
    return out.reshape(N, Cout, H, W)


def head_block_reference(x_nchw, w3, b3, wfc, bfc):
    """Pure-JAX reference mirroring the PyTorch forward (NCHW convs)."""
    dn = ("NCHW", "OIHW", "NCHW")
    h = lax.conv_general_dilated(x_nchw, w3, (1, 1), ((1, 1), (1, 1)),
                                 dimension_numbers=dn)
    h = h + b3.reshape(1, -1, 1, 1)
    h = jnp.maximum(h, 0.0)
    o = lax.conv_general_dilated(h, wfc, (1, 1), ((0, 0), (0, 0)),
                                 dimension_numbers=dn)
    return o + bfc.reshape(1, -1, 1, 1)


if __name__ == "__main__":
    # Small shapes consistent with the module's forward.
    N, Cin, H, W = 2, 4, 16, 16
    Chead, Cout = 32, 8
    prior_bias = -2.19

    key = jax.random.PRNGKey(0)
    k_x, k_w3, k_b3, k_wfc = jax.random.split(key, 4)

    x = jax.random.normal(k_x, (N, Cin, H, W), jnp.float32)
    # Deterministic synthetic parameters (PyTorch layouts).
    w3 = 0.1 * jax.random.normal(k_w3, (Chead, Cin, 3, 3), jnp.float32)
    b3 = 0.1 * jax.random.normal(k_b3, (Chead,), jnp.float32)
    wfc = 0.1 * jax.random.normal(k_wfc, (Cout, Chead, 1, 1), jnp.float32)
    bfc = jnp.full((Cout,), prior_bias, jnp.float32)  # nn.init.constant_(fc.bias, prior_bias)

    ref = head_block_reference(x, w3, b3, wfc, bfc)

    # f32, default tile (whole image per step at this tiny size).
    out = jax.block_until_ready(head_block(x, w3, b3, wfc, bfc))
    assert out.shape == (N, Cout, H, W)
    assert jnp.allclose(out, ref, atol=1e-4, rtol=1e-4), "f32 mismatch vs reference"

    # f32, forced small row-tile (exercises the halo / multi-tile grid path).
    out_t = jax.block_until_ready(
        head_block(x, w3, b3, wfc, bfc, target_tile_lanes=128))
    assert jnp.allclose(out_t, ref, atol=1e-4, rtol=1e-4), "tiled f32 mismatch vs reference"

    # bf16 MXU operands (v6e/v7x fast path); f32 accumulation keeps accuracy.
    out_bf16 = jax.block_until_ready(
        head_block(x, w3, b3, wfc, bfc, compute_dtype=jnp.bfloat16))
    assert jnp.allclose(out_bf16, ref, atol=1e-1, rtol=1e-1), "bf16 mismatch vs reference"

    # bf16 + forced small row-tile.
    out_bf16_t = jax.block_until_ready(
        head_block(x, w3, b3, wfc, bfc, compute_dtype=jnp.bfloat16,
                   target_tile_lanes=128))
    assert jnp.allclose(out_bf16_t, ref, atol=1e-1, rtol=1e-1), "tiled bf16 mismatch vs reference"

    print("KERNEL_OK")
</pallas_src>

<mosaic_0001>
module attributes {stable_mosaic.version = 11 : i64} {
  func.func @_head_block_kernel(%arg0: i32, %arg1: i32, %arg2: memref<1x8x256xf32, #tpu.memory_space<vmem>>, %arg3: memref<1x1x8x16xf32, #tpu.memory_space<vmem>>, %arg4: memref<1x1x8x16xf32, #tpu.memory_space<vmem>>, %arg5: memref<32x72xf32, #tpu.memory_space<vmem>>, %arg6: memref<32x1xf32, #tpu.memory_space<vmem>>, %arg7: memref<8x32xf32, #tpu.memory_space<vmem>>, %arg8: memref<8x1xf32, #tpu.memory_space<vmem>>, %arg9: memref<1x8x256xf32, #tpu.memory_space<vmem>>, %arg10: memref<72x256xf32, #tpu.memory_space<vmem>>) attributes {dimension_semantics = [#tpu.dimension_semantics<parallel>, #tpu.dimension_semantics<parallel>], iteration_bounds = array<i64: 2, 1>, scalar_prefetch = 0 : i64, scratch_operands = 1 : i64, tpu.core_type = #tpu.core_type<tc>, window_params = [{transform_indices = @transform_0, window_bounds = array<i64: 1, 8, 256>}, {transform_indices = @transform_1, window_bounds = array<i64: 1, 1, 8, 16>}, {transform_indices = @transform_2, window_bounds = array<i64: 1, 1, 8, 16>}, {pipeline_mode = #tpu.pipeline_mode<synchronous>, transform_indices = @transform_3, window_bounds = array<i64: 32, 72>}, {pipeline_mode = #tpu.pipeline_mode<synchronous>, transform_indices = @transform_4, window_bounds = array<i64: 32, 1>}, {pipeline_mode = #tpu.pipeline_mode<synchronous>, transform_indices = @transform_5, window_bounds = array<i64: 8, 32>}, {pipeline_mode = #tpu.pipeline_mode<synchronous>, transform_indices = @transform_6, window_bounds = array<i64: 8, 1>}, {transform_indices = @transform_7, window_bounds = array<i64: 1, 8, 256>}]} {
    %c0 = arith.constant 0 : index
    %c0_0 = arith.constant 0 : index
    %c0_1 = arith.constant 0 : index
    %c0_2 = arith.constant 0 : index
    %0 = vector.load %arg3[%c0, %c0_0, %c0_1, %c0_2] : memref<1x1x8x16xf32, #tpu.memory_space<vmem>>, vector<1x1x8x16xf32>
    %1 = vector.shape_cast %0 : vector<1x1x8x16xf32> to vector<8x16xf32>
    %c0_3 = arith.constant 0 : index
    %c0_4 = arith.constant 0 : index
    %c0_5 = arith.constant 0 : index
    %2 = vector.load %arg2[%c0_3, %c0_4, %c0_5] : memref<1x8x256xf32, #tpu.memory_space<vmem>>, vector<1x8x256xf32>
    %3 = vector.shape_cast %2 : vector<1x8x256xf32> to vector<8x256xf32>
    %c0_6 = arith.constant 0 : index
    %c0_7 = arith.constant 0 : index
    %c0_8 = arith.constant 0 : index
    %c0_9 = arith.constant 0 : index
    %4 = vector.load %arg4[%c0_6, %c0_7, %c0_8, %c0_9] : memref<1x1x8x16xf32, #tpu.memory_space<vmem>>, vector<1x1x8x16xf32>
    %5 = vector.shape_cast %4 : vector<1x1x8x16xf32> to vector<8x16xf32>
    %6 = tpu.concatenate %1, %3, %5 in 1 : vector<8x16xf32>, vector<8x256xf32>, vector<8x16xf32> -> vector<8x288xf32>
    %7 = tpu.iota {dimensions = array<i32: 1>} : vector<1x288xi32>
    %c16_i32 = arith.constant 16 : i32
    %c0_i32 = arith.constant 0 : i32
    %8 = arith.cmpi eq, %c16_i32, %c0_i32 : i32
    %c1_i32 = arith.constant 1 : i32
    %9 = arith.select %8, %c1_i32, %c16_i32 : i32
    %10 = vector.broadcast %9 : i32 to vector<1x288xi32>
    %11 = arith.remsi %7, %10 : vector<1x288xi32>
    %c0_i32_10 = arith.constant 0 : i32
    %12 = vector.broadcast %c0_i32_10 : i32 to vector<1x288xi32>
    %13 = arith.cmpi ne, %11, %12 : vector<1x288xi32>
    %c0_i32_11 = arith.constant 0 : i32
    %14 = vector.broadcast %c0_i32_11 : i32 to vector<1x288xi32>
    %15 = arith.cmpi slt, %11, %14 : vector<1x288xi32>
    %c0_i32_12 = arith.constant 0 : i32
    %16 = arith.cmpi slt, %9, %c0_i32_12 : i32
    %17 = vector.broadcast %16 : i1 to vector<1x288xi1>
    %18 = vector.broadcast %17 : vector<1x288xi1> to vector<1x288xi1>
    %19 = arith.xori %15, %18 : vector<1x288xi1>
    %20 = arith.andi %19, %13 : vector<1x288xi1>
    %21 = vector.broadcast %9 : i32 to vector<1x288xi32>
    %22 = arith.addi %11, %21 : vector<1x288xi32>
    %23 = arith.select %20, %22, %11 : vector<1x288xi1>, vector<1x288xi32>
    %c1_i32_13 = arith.constant 1 : i32
    %24 = vector.broadcast %c1_i32_13 : i32 to vector<1x288xi32>
    %25 = arith.cmpi sge, %23, %24 : vector<1x288xi32>
    %26 = arith.extui %25 : vector<1x288xi1> to vector<1x288xi32>
    %27 = arith.sitofp %26 : vector<1x288xi32> to vector<1x288xf32>
    %c14_i32 = arith.constant 14 : i32
    %28 = vector.broadcast %c14_i32 : i32 to vector<1x288xi32>
    %29 = arith.cmpi sle, %23, %28 : vector<1x288xi32>
    %30 = arith.extui %29 : vector<1x288xi1> to vector<1x288xi32>
    %31 = arith.sitofp %30 : vector<1x288xi32> to vector<1x288xf32>
    %cst = arith.constant 0.000000e+00 : f32
    %32 = vector.broadcast %cst : f32 to vector<8x1xf32>
    %33 = vector.extract_strided_slice %6 {offsets = [0, 0], sizes = [8, 287], strides = [1, 1]} : vector<8x288xf32> to vector<8x287xf32>
    %34 = tpu.concatenate %32, %33 in 1 : vector<8x1xf32>, vector<8x287xf32> -> vector<8x288xf32>
    %35 = vector.broadcast %27 : vector<1x288xf32> to vector<8x288xf32>
    %36 = arith.mulf %34, %35 : vector<8x288xf32>
    %37 = vector.extract_strided_slice %6 {offsets = [0, 1], sizes = [8, 287], strides = [1, 1]} : vector<8x288xf32> to vector<8x287xf32>
    %38 = tpu.concatenate %37, %32 in 1 : vector<8x287xf32>, vector<8x1xf32> -> vector<8x288xf32>
    %39 = vector.broadcast %31 : vector<1x288xf32> to vector<8x288xf32>
    %40 = arith.mulf %38, %39 : vector<8x288xf32>
    %41 = vector.extract_strided_slice %36 {offsets = [0, 0], sizes = [8, 256], strides = [1, 1]} : vector<8x288xf32> to vector<8x256xf32>
    %c0_14 = arith.constant 0 : index
    %c0_15 = arith.constant 0 : index
    %42 = vector.load %arg10[%c0_14, %c0_15] : memref<72x256xf32, #tpu.memory_space<vmem>>, vector<8x256xf32>
    tpu.vector_store %arg10[%c0_14, %c0_15], %41 {strides = array<i32>} : memref<72x256xf32, #tpu.memory_space<vmem>>, vector<8x256xf32>,
    %43 = vector.extract_strided_slice %6 {offsets = [0, 0], sizes = [8, 256], strides = [1, 1]} : vector<8x288xf32> to vector<8x256xf32>
    %c8 = arith.constant 8 : index
    %c0_16 = arith.constant 0 : index
    %44 = vector.load %arg10[%c8, %c0_16] : memref<72x256xf32, #tpu.memory_space<vmem>>, vector<8x256xf32>
    tpu.vector_store %arg10[%c8, %c0_16], %43 {strides = array<i32>} : memref<72x256xf32, #tpu.memory_space<vmem>>, vector<8x256xf32>,
    %45 = vector.extract_strided_slice %40 {offsets = [0, 0], sizes = [8, 256], strides = [1, 1]} : vector<8x288xf32> to vector<8x256xf32>
    %c16 = arith.constant 16 : index
    %c0_17 = arith.constant 0 : index
    %46 = vector.load %arg10[%c16, %c0_17] : memref<72x256xf32, #tpu.memory_space<vmem>>, vector<8x256xf32>
    tpu.vector_store %arg10[%c16, %c0_17], %45 {strides = array<i32>} : memref<72x256xf32, #tpu.memory_space<vmem>>, vector<8x256xf32>,
    %47 = vector.extract_strided_slice %36 {offsets = [0, 16], sizes = [8, 256], strides = [1, 1]} : vector<8x288xf32> to vector<8x256xf32>
    %c24 = arith.constant 24 : index
    %c0_18 = arith.constant 0 : index
    %48 = vector.load %arg10[%c24, %c0_18] : memref<72x256xf32, #tpu.memory_space<vmem>>, vector<8x256xf32>
    tpu.vector_store %arg10[%c24, %c0_18], %47 {strides = array<i32>} : memref<72x256xf32, #tpu.memory_space<vmem>>, vector<8x256xf32>,
    %49 = vector.extract_strided_slice %6 {offsets = [0, 16], sizes = [8, 256], strides = [1, 1]} : vector<8x288xf32> to vector<8x256xf32>
    %c32 = arith.constant 32 : index
    %c0_19 = arith.constant 0 : index
    %50 = vector.load %arg10[%c32, %c0_19] : memref<72x256xf32, #tpu.memory_space<vmem>>, vector<8x256xf32>
    tpu.vector_store %arg10[%c32, %c0_19], %49 {strides = array<i32>} : memref<72x256xf32, #tpu.memory_space<vmem>>, vector<8x256xf32>,
    %51 = vector.extract_strided_slice %40 {offsets = [0, 16], sizes = [8, 256], strides = [1, 1]} : vector<8x288xf32> to vector<8x256xf32>
    %c40 = arith.constant 40 : index
    %c0_20 = arith.constant 0 : index
    %52 = vector.load %arg10[%c40, %c0_20] : memref<72x256xf32, #tpu.memory_space<vmem>>, vector<8x256xf32>
    tpu.vector_store %arg10[%c40, %c0_20], %51 {strides = array<i32>} : memref<72x256xf32, #tpu.memory_space<vmem>>, vector<8x256xf32>,
    %53 = vector.extract_strided_slice %36 {offsets = [0, 32], sizes = [8, 256], strides = [1, 1]} : vector<8x288xf32> to vector<8x256xf32>
    %c48 = arith.constant 48 : index
    %c0_21 = arith.constant 0 : index
    %54 = vector.load %arg10[%c48, %c0_21] : memref<72x256xf32, #tpu.memory_space<vmem>>, vector<8x256xf32>
    tpu.vector_store %arg10[%c48, %c0_21], %53 {strides = array<i32>} : memref<72x256xf32, #tpu.memory_space<vmem>>, vector<8x256xf32>,
    %55 = vector.extract_strided_slice %6 {offsets = [0, 32], sizes = [8, 256], strides = [1, 1]} : vector<8x288xf32> to vector<8x256xf32>
    %c56 = arith.constant 56 : index
    %c0_22 = arith.constant 0 : index
    %56 = vector.load %arg10[%c56, %c0_22] : memref<72x256xf32, #tpu.memory_space<vmem>>, vector<8x256xf32>
    tpu.vector_store %arg10[%c56, %c0_22], %55 {strides = array<i32>} : memref<72x256xf32, #tpu.memory_space<vmem>>, vector<8x256xf32>,
    %57 = vector.extract_strided_slice %40 {offsets = [0, 32], sizes = [8, 256], strides = [1, 1]} : vector<8x288xf32> to vector<8x256xf32>
    %c64 = arith.constant 64 : index
    %c0_23 = arith.constant 0 : index
    %58 = vector.load %arg10[%c64, %c0_23] : memref<72x256xf32, #tpu.memory_space<vmem>>, vector<8x256xf32>
    tpu.vector_store %arg10[%c64, %c0_23], %57 {strides = array<i32>} : memref<72x256xf32, #tpu.memory_space<vmem>>, vector<8x256xf32>,
    %c0_24 = arith.constant 0 : index
    %c0_25 = arith.constant 0 : index
    %59 = vector.load %arg5[%c0_24, %c0_25] : memref<32x72xf32, #tpu.memory_space<vmem>>, vector<32x72xf32>
    %c0_26 = arith.constant 0 : index
    %c0_27 = arith.constant 0 : index
    %60 = vector.load %arg10[%c0_26, %c0_27] : memref<72x256xf32, #tpu.memory_space<vmem>>, vector<72x256xf32>
    %cst_28 = arith.constant dense<0.000000e+00> : vector<32x256xf32>
    %61 = tpu.matmul %59, %60, %cst_28 {dimension_numbers = #tpu.dot_dimension_numbers<[1], [0], [0], [1], [0, 0, 1, 1], [], []>} : vector<32x72xf32>, vector<72x256xf32>, vector<32x256xf32> -> vector<32x256xf32>
    %c0_29 = arith.constant 0 : index
    %c0_30 = arith.constant 0 : index
    %62 = vector.load %arg6[%c0_29, %c0_30] : memref<32x1xf32, #tpu.memory_space<vmem>>, vector<32x1xf32>
    %63 = vector.broadcast %62 : vector<32x1xf32> to vector<32x256xf32>
    %64 = arith.addf %61, %63 : vector<32x256xf32>
    %cst_31 = arith.constant 0.000000e+00 : f32
    %65 = vector.broadcast %cst_31 : f32 to vector<32x256xf32>
    %66 = arith.maximumf %64, %65 : vector<32x256xf32>
    %c0_32 = arith.constant 0 : index
    %c0_33 = arith.constant 0 : index
    %67 = vector.load %arg7[%c0_32, %c0_33] : memref<8x32xf32, #tpu.memory_space<vmem>>, vector<8x32xf32>
    %cst_34 = arith.constant dense<0.000000e+00> : vector<8x256xf32>
    %68 = tpu.matmul %67, %66, %cst_34 {dimension_numbers = #tpu.dot_dimension_numbers<[1], [0], [0], [1], [0, 0, 1, 1], [], []>} : vector<8x32xf32>, vector<32x256xf32>, vector<8x256xf32> -> vector<8x256xf32>
    %c0_35 = arith.constant 0 : index
    %c0_36 = arith.constant 0 : index
    %69 = vector.load %arg8[%c0_35, %c0_36] : memref<8x1xf32, #tpu.memory_space<vmem>>, vector<8x1xf32>
    %70 = vector.broadcast %69 : vector<8x1xf32> to vector<8x256xf32>
    %71 = arith.addf %68, %70 : vector<8x256xf32>
    %c0_37 = arith.constant 0 : index
    %c0_38 = arith.constant 0 : index
    %c0_39 = arith.constant 0 : index
    %72 = vector.load %arg9[%c0_37, %c0_38, %c0_39] : memref<1x8x256xf32, #tpu.memory_space<vmem>>, vector<1x8x256xf32>
    %73 = vector.shape_cast %72 : vector<1x8x256xf32> to vector<8x256xf32>
    %74 = vector.shape_cast %71 : vector<8x256xf32> to vector<1x8x256xf32>
    tpu.vector_store %arg9[%c0_37, %c0_38, %c0_39], %74 {strides = array<i32>} : memref<1x8x256xf32, #tpu.memory_space<vmem>>, vector<1x8x256xf32>,
    return
  }
  func.func @transform_0(%arg0: i32, %arg1: i32) -> (i32, i32, i32) {
    %c0_i32 = arith.constant 0 : i32
    %c0_i32_0 = arith.constant 0 : i32
    return %arg0, %c0_i32, %arg1 : i32, i32, i32
  }
  func.func @transform_1(%arg0: i32, %arg1: i32) -> (i32, i32, i32, i32) {
    %c0_i32 = arith.constant 0 : i32
    %c0_i32_0 = arith.constant 0 : i32
    %c0_i32_1 = arith.constant 0 : i32
    return %arg0, %arg1, %c0_i32, %c0_i32_0 : i32, i32, i32, i32
  }
  func.func @transform_2(%arg0: i32, %arg1: i32) -> (i32, i32, i32, i32) {
    %c0_i32 = arith.constant 0 : i32
    %c0_i32_0 = arith.constant 0 : i32
    %c0_i32_1 = arith.constant 0 : i32
    return %arg0, %arg1, %c0_i32, %c0_i32_0 : i32, i32, i32, i32
  }
  func.func @transform_3(%arg0: i32, %arg1: i32) -> (i32, i32) {
    %c0_i32 = arith.constant 0 : i32
    %c0_i32_0 = arith.constant 0 : i32
    %c0_i32_1 = arith.constant 0 : i32
    return %c0_i32, %c0_i32_0 : i32, i32
  }
  func.func @transform_4(%arg0: i32, %arg1: i32) -> (i32, i32) {
    %c0_i32 = arith.constant 0 : i32
    %c0_i32_0 = arith.constant 0 : i32
    %c0_i32_1 = arith.constant 0 : i32
    return %c0_i32, %c0_i32_0 : i32, i32
  }
  func.func @transform_5(%arg0: i32, %arg1: i32) -> (i32, i32) {
    %c0_i32 = arith.constant 0 : i32
    %c0_i32_0 = arith.constant 0 : i32
    %c0_i32_1 = arith.constant 0 : i32
    return %c0_i32, %c0_i32_0 : i32, i32
  }
  func.func @transform_6(%arg0: i32, %arg1: i32) -> (i32, i32) {
    %c0_i32 = arith.constant 0 : i32
    %c0_i32_0 = arith.constant 0 : i32
    %c0_i32_1 = arith.constant 0 : i32
    return %c0_i32, %c0_i32_0 : i32, i32
  }
  func.func @transform_7(%arg0: i32, %arg1: i32) -> (i32, i32, i32) {
    %c0_i32 = arith.constant 0 : i32
    %c0_i32_0 = arith.constant 0 : i32
    return %arg0, %c0_i32, %arg1 : i32, i32, i32
  }
}

</mosaic_0001>

<llo_original>
// kernel: tpu_custom_call.1
$region0: #{tpu_custom_call.1}
  #allocation0 [shape = 'u32[]', space=smem, size = 0x4, offset = 0x4, fixed_abs, tag = 'smem constant byte address 0x4 - core index']
  #allocation1 [shape = 'u32[144,128]{1,0:T(1,128)}', space=vmem, size = 0x12000, scoped, tag = 'internal scratch']
  #allocation2 [shape = 'f32[72,256]{1,0:T(8,128)}', space=vmem, size = 0x12000, scoped, tag = 'scratch operand']
  %s0 = inlined_call_operand.vmem [shape: f32[2,8,256], index: 0, kind: input, shape index: {}]
  %s1 = inlined_call_operand.hbm [shape: f32[2,1,8,16], index: 1, kind: input, shape index: {}]
  %s2 = inlined_call_operand.hbm [shape: f32[2,1,8,16], index: 2, kind: input, shape index: {}]
  %s3 = inlined_call_operand.hbm [shape: f32[32,72], index: 3, kind: input, shape index: {}]
  %s4 = inlined_call_operand.vmem [shape: f32[32,1], index: 4, kind: input, shape index: {}]
  %s5 = inlined_call_operand.vmem [shape: f32[8,32], index: 5, kind: input, shape index: {}]
  %s6 = inlined_call_operand.vmem [shape: f32[8,1], index: 6, kind: input, shape index: {}]
  %s7 = inlined_call_operand.hbm [shape: f32[2,8,256], index: 7, kind: output, shape index: {}]
  %s8 = sld [smem:[#allocation0]]
  $region73: #{tpu_custom_call.1} parent=0
    _
  %s10 = ssub.s32 1, %s8
  %s11 = scalar_select 0, %s10, %s8
  $region1: #{tpu_custom_call.1} parent=0
    #allocation3 [shape = 'u8[8192]{0}', space=vmem, size = 0x2000, scoped, tag = 'input window, operand 1']
    #allocation4 [shape = 's32[2]{0}', space=sflag, size = 0x8, scoped, tag = 'scoped memory for tpu_custom_call.1']
    #allocation5 [shape = 's32[2]{0}', space=sflag, size = 0x8, scoped, tag = 'scoped memory for tpu_custom_call.1']
    #allocation6 [shape = 'u8[8192]{0}', space=vmem, size = 0x2000, scoped, tag = 'input window, operand 2']
    #allocation7 [shape = 's32[2]{0}', space=sflag, size = 0x8, scoped, tag = 'scoped memory for tpu_custom_call.1']
    #allocation8 [shape = 'u8[16384]{0}', space=vmem, size = 0x4000, scoped, tag = 'input window, operand 3, single buffered']
    #allocation9 [shape = 'u8[16384]{0}', space=vmem, size = 0x4000, scoped, tag = 'output window, operand 0']
    %12 = vsyncpa [#allocation4], 0
    %s13 = scalar_lea.sflag [#allocation4], 1
    %14 = vsyncpa %s13, 0
    %15 = vsyncpa [#allocation7], 0
    %s16 = scalar_lea.sflag [#allocation7], 1
    %17 = vsyncpa %s16, 0
    %18 = vsyncpa [#allocation5], 0
    %s19 = scalar_lea.sflag [#allocation5], 1
    %20 = vsyncpa %s19, 0
    loop: start=0, step=1, limit=4
    $region2: #{tpu_custom_call.1} parent=1 // loop_pre_header
      _
    $region3: #{tpu_custom_call.1} parent=1 // loop_header
      %s22 = sphi 0, %s26
      %p23 = scmp.ge.s32.totalorder %s22, 4
      %s29 = sphi 0, %s41
      %s30 = sphi 0, %s37
      %s31 = sphi 0, %s29
      %s32 = sphi 0, %s30
      %s33 = sphi 0, %s31
      %s34 = sphi 0, %s32
      %s46 = sphi 0, %s48
      %s49 = sphi 0, %s46
      %s50 = sphi 0, %s49
      %s66 = sphi 0, %s50
      %s74 = sphi 0, %s76
      %s77 = sphi 0, %s74
      %s78 = sphi 0, %s77
      %s94 = sphi 0, %s78
      %s102 = sphi 0, %s104
      %s105 = sphi 0, %s102
      %s106 = sphi 0, %s105
      %s122 = sphi 0, %s106
      %s126 = sphi 0, %s126
      %s128 = sphi 0, %s126
      %s129 = sphi 0, %s128
      %s143 = sphi 0, %s129
      %s147 = sphi 0, %s147
      %s149 = sphi 0, %s147
      %s150 = sphi 0, %s149
      %s164 = sphi 0, %s150
      %s168 = sphi 0, %s168
      %s170 = sphi 0, %s168
      %s171 = sphi 0, %s170
      %s185 = sphi 0, %s171
      %s189 = sphi 0, %s189
      %s191 = sphi 0, %s189
      %s192 = sphi 0, %s191
      %s206 = sphi 0, %s192
      %s214 = sphi 0, %s216
      %s217 = sphi 0, %s214
      %s218 = sphi 0, %s217
      %s234 = sphi 0, %s218
    $region4: #{tpu_custom_call.1} parent=1 // loop_header_branch
      %25 = sbr.rel (%p23) target = $region8
    $region5: #{tpu_custom_call.1} parent=1 // loop_body
      %s27 = ssub.s32 %s22, 1
      %s28 = ssub.s32 %s22, 2
      %s35 = sadd.s32 1, %s30
      %p36 = scmp.ge.s32.totalorder %s35, 1
      %s37 = scalar_select %p36, 0, %s35
      %s38 = sadd.s32 1, %s29
      %s39 = scalar_select %p36, %s38, %s29
      %p40 = scmp.ge.s32.totalorder %s39, 2
      %s41 = scalar_select %p40, 0, %s39
      %s42 = ssub.s32 %s29, %s41
      %s43 = ssub.s32 %s30, %s37
      %s44 = sor.u32 %s42, %s43
      %p45 = scmp.eq.s32.totalorder %s44, 0
      %s47 = sadd.s32 %s46, 1
      %s48 = scalar_select %p45, %s46, %s47
      %p51 = pneg %p45
      %p52 = scmp.eq.s32.totalorder %s22, 1
      %p53 = por %p51, %p52
      %p54 = scmp.ne.s32.totalorder %s46, %s49
      %p55 = scmp.eq.s32.totalorder %s22, 0
      %p56 = por %p54, %p55
      %p57 = scmp.ne.s32.totalorder %s46, %s49
      %p58 = scmp.eq.s32.totalorder %s27, 1
      %p59 = por %p57, %p58
      %p60 = scmp.ne.s32.totalorder %s49, %s50
      %p61 = scmp.eq.s32.totalorder %s27, 0
      %p62 = por %p60, %p61
      %p63 = scmp.ne.s32.totalorder %s49, %s50
      %p64 = scmp.eq.s32.totalorder %s28, 1
      %p65 = por %p63, %p64
      %p67 = scmp.ne.s32.totalorder %s50, %s66
      %p68 = scmp.eq.s32.totalorder %s28, 0
      %p69 = por %p67, %p68
      %s70 = ssub.s32 %s29, %s41
      %s71 = ssub.s32 %s30, %s37
      %s72 = sor.u32 %s70, %s71
      %p73 = scmp.eq.s32.totalorder %s72, 0
      %s75 = sadd.s32 %s74, 1
      %s76 = scalar_select %p73, %s74, %s75
      %p79 = pneg %p73
      %p80 = scmp.eq.s32.totalorder %s22, 1
      %p81 = por %p79, %p80
      %p82 = scmp.ne.s32.totalorder %s74, %s77
      %p83 = scmp.eq.s32.totalorder %s22, 0
      %p84 = por %p82, %p83
      %p85 = scmp.ne.s32.totalorder %s74, %s77
      %p86 = scmp.eq.s32.totalorder %s27, 1
      %p87 = por %p85, %p86
      %p88 = scmp.ne.s32.totalorder %s77, %s78
      %p89 = scmp.eq.s32.totalorder %s27, 0
      %p90 = por %p88, %p89
      %p91 = scmp.ne.s32.totalorder %s77, %s78
      %p92 = scmp.eq.s32.totalorder %s28, 1
      %p93 = por %p91, %p92
      %p95 = scmp.ne.s32.totalorder %s78, %s94
      %p96 = scmp.eq.s32.totalorder %s28, 0
      %p97 = por %p95, %p96
      %s98 = ssub.s32 %s29, %s41
      %s99 = ssub.s32 %s30, %s37
      %s100 = sor.u32 %s98, %s99
      %p101 = scmp.eq.s32.totalorder %s100, 0
      %s103 = sadd.s32 %s102, 1
      %s104 = scalar_select %p101, %s102, %s103
      %p107 = pneg %p101
      %p108 = scmp.eq.s32.totalorder %s22, 1
      %p109 = por %p107, %p108
      %p110 = scmp.ne.s32.totalorder %s102, %s105
      %p111 = scmp.eq.s32.totalorder %s22, 0
      %p112 = por %p110, %p111
      %p113 = scmp.ne.s32.totalorder %s102, %s105
      %p114 = scmp.eq.s32.totalorder %s27, 1
      %p115 = por %p113, %p114
      %p116 = scmp.ne.s32.totalorder %s105, %s106
      %p117 = scmp.eq.s32.totalorder %s27, 0
      %p118 = por %p116, %p117
      %p119 = scmp.ne.s32.totalorder %s105, %s106
      %p120 = scmp.eq.s32.totalorder %s28, 1
      %p121 = por %p119, %p120
      %p123 = scmp.ne.s32.totalorder %s106, %s122
      %p124 = scmp.eq.s32.totalorder %s28, 0
      %p125 = por %p123, %p124
      %s127 = sadd.s32 %s126, 1
      %p130 = scmp.eq.s32.totalorder %s22, 1
      %p131 = scmp.ne.s32.totalorder %s126, %s128
      %p132 = scmp.eq.s32.totalorder %s22, 0
      %p133 = por %p131, %p132
      %p134 = scmp.ne.s32.totalorder %s126, %s128
      %p135 = scmp.eq.s32.totalorder %s27, 1
      %p136 = por %p134, %p135
      %p137 = scmp.ne.s32.totalorder %s128, %s129
      %p138 = scmp.eq.s32.totalorder %s27, 0
      %p139 = por %p137, %p138
      %p140 = scmp.ne.s32.totalorder %s128, %s129
      %p141 = scmp.eq.s32.totalorder %s28, 1
      %p142 = por %p140, %p141
      %p144 = scmp.ne.s32.totalorder %s129, %s143
      %p145 = scmp.eq.s32.totalorder %s28, 0
      %p146 = por %p144, %p145
      %s148 = sadd.s32 %s147, 1
      %p151 = scmp.eq.s32.totalorder %s22, 1
      %p152 = scmp.ne.s32.totalorder %s147, %s149
      %p153 = scmp.eq.s32.totalorder %s22, 0
      %p154 = por %p152, %p153
      %p155 = scmp.ne.s32.totalorder %s147, %s149
      %p156 = scmp.eq.s32.totalorder %s27, 1
      %p157 = por %p155, %p156
      %p158 = scmp.ne.s32.totalorder %s149, %s150
      %p159 = scmp.eq.s32.totalorder %s27, 0
      %p160 = por %p158, %p159
      %p161 = scmp.ne.s32.totalorder %s149, %s150
      %p162 = scmp.eq.s32.totalorder %s28, 1
      %p163 = por %p161, %p162
      %p165 = scmp.ne.s32.totalorder %s150, %s164
      %p166 = scmp.eq.s32.totalorder %s28, 0
      %p167 = por %p165, %p166
      %s169 = sadd.s32 %s168, 1
      %p172 = scmp.eq.s32.totalorder %s22, 1
      %p173 = scmp.ne.s32.totalorder %s168, %s170
      %p174 = scmp.eq.s32.totalorder %s22, 0
      %p175 = por %p173, %p174
      %p176 = scmp.ne.s32.totalorder %s168, %s170
      %p177 = scmp.eq.s32.totalorder %s27, 1
      %p178 = por %p176, %p177
      %p179 = scmp.ne.s32.totalorder %s170, %s171
      %p180 = scmp.eq.s32.totalorder %s27, 0
      %p181 = por %p179, %p180
      %p182 = scmp.ne.s32.totalorder %s170, %s171
      %p183 = scmp.eq.s32.totalorder %s28, 1
      %p184 = por %p182, %p183
      %p186 = scmp.ne.s32.totalorder %s171, %s185
      %p187 = scmp.eq.s32.totalorder %s28, 0
      %p188 = por %p186, %p187
      %s190 = sadd.s32 %s189, 1
      %p193 = scmp.eq.s32.totalorder %s22, 1
      %p194 = scmp.ne.s32.totalorder %s189, %s191
      %p195 = scmp.eq.s32.totalorder %s22, 0
      %p196 = por %p194, %p195
      %p197 = scmp.ne.s32.totalorder %s189, %s191
      %p198 = scmp.eq.s32.totalorder %s27, 1
      %p199 = por %p197, %p198
      %p200 = scmp.ne.s32.totalorder %s191, %s192
      %p201 = scmp.eq.s32.totalorder %s27, 0
      %p202 = por %p200, %p201
      %p203 = scmp.ne.s32.totalorder %s191, %s192
      %p204 = scmp.eq.s32.totalorder %s28, 1
      %p205 = por %p203, %p204
      %p207 = scmp.ne.s32.totalorder %s192, %s206
      %p208 = scmp.eq.s32.totalorder %s28, 0
      %p209 = por %p207, %p208
      %s210 = ssub.s32 %s29, %s41
      %s211 = ssub.s32 %s30, %s37
      %s212 = sor.u32 %s210, %s211
      %p213 = scmp.eq.s32.totalorder %s212, 0
      %s215 = sadd.s32 %s214, 1
      %s216 = scalar_select %p213, %s214, %s215
      %p219 = pneg %p213
      %p220 = scmp.eq.s32.totalorder %s22, 1
      %p221 = por %p219, %p220
      %p222 = scmp.ne.s32.totalorder %s214, %s217
      %p223 = scmp.eq.s32.totalorder %s22, 0
      %p224 = por %p222, %p223
      %p225 = scmp.ne.s32.totalorder %s214, %s217
      %p226 = scmp.eq.s32.totalorder %s27, 1
      %p227 = por %p225, %p226
      %p228 = scmp.ne.s32.totalorder %s217, %s218
      %p229 = scmp.eq.s32.totalorder %s27, 0
      %p230 = por %p228, %p229
      %p231 = scmp.ne.s32.totalorder %s217, %s218
      %p232 = scmp.eq.s32.totalorder %s28, 1
      %p233 = por %p231, %p232
      %p235 = scmp.ne.s32.totalorder %s218, %s234
      %p236 = scmp.eq.s32.totalorder %s28, 0
      %p237 = por %p235, %p236
      %p238 = scmp.le.s32.totalorder 1, %s22
      %p239 = scmp.lt.s32.totalorder %s22, 3
      %p240 = pnand %p238, %p239
      %p241 = pneg %p240
      // Predicated region
      $region9: #{tpu_custom_call.1} parent=5 // pred_check
        _
      $region10: #{tpu_custom_call.1} parent=5 // pred_check_branch
        %243 = sbr.rel (%p240) target = $region12
      $region11: #{tpu_custom_call.1} parent=5 // pred_region
        %s244 = ssub.s32 %s22, 1
        // Predicated region
        $region13: #{tpu_custom_call.1} parent=11 // pred_check
          %p245 = pneg %p139
        $region14: #{tpu_custom_call.1} parent=11 // pred_check_branch
          %247 = sbr.rel (%p245) target = $region16
        $region15: #{tpu_custom_call.1} parent=11 // pred_region
          %s249 = ssub.s32 512, 512
          %250 = vsyncadd [#allocation7], %s249
          %s251 = sshll.u32 [#allocation8], 4
          %s252 = int_to_ptr.vmem [resolvable:$true] %s251
          %257 = dma.hbm_to_vmem [thread:$0]  %s3, 512, %s252, [#allocation7], 128, 128, 8
        $region16: #{tpu_custom_call.1} parent=11 // pred_fallthru
          _
        // Predicated region
        $region17: #{tpu_custom_call.1} parent=11 // pred_check
          %p258 = pneg %p160
        $region18: #{tpu_custom_call.1} parent=11 // pred_check_branch
          %260 = sbr.rel (%p258) target = $region20
        $region19: #{tpu_custom_call.1} parent=11 // pred_region
          _
        $region20: #{tpu_custom_call.1} parent=11 // pred_fallthru
          _
        // Predicated region
        $region21: #{tpu_custom_call.1} parent=11 // pred_check
          %p261 = pneg %p181
        $region22: #{tpu_custom_call.1} parent=11 // pred_check_branch
          %263 = sbr.rel (%p261) target = $region24
        $region23: #{tpu_custom_call.1} parent=11 // pred_region
          _
        $region24: #{tpu_custom_call.1} parent=11 // pred_fallthru
          _
        // Predicated region
        $region25: #{tpu_custom_call.1} parent=11 // pred_check
          %p264 = pneg %p202
        $region26: #{tpu_custom_call.1} parent=11 // pred_check_branch
          %266 = sbr.rel (%p264) target = $region28
        $region27: #{tpu_custom_call.1} parent=11 // pred_region
          _
        $region28: #{tpu_custom_call.1} parent=11 // pred_fallthru
          _
      $region12: #{tpu_custom_call.1} parent=5 // pred_fallthru
        _
      %p267 = scmp.lt.s32.totalorder %s22, 2
      // Predicated region
      $region29: #{tpu_custom_call.1} parent=5 // pred_check
        %p268 = pneg %p267
      $region30: #{tpu_custom_call.1} parent=5 // pred_check_branch
        %270 = sbr.rel (%p268) target = $region32
      $region31: #{tpu_custom_call.1} parent=5 // pred_region
        // Predicated region
        $region33: #{tpu_custom_call.1} parent=31 // pred_check
          %p271 = pneg %p56
        $region34: #{tpu_custom_call.1} parent=31 // pred_check_branch
          %273 = sbr.rel (%p271) target = $region36
        $region35: #{tpu_custom_call.1} parent=31 // pred_region
          %s274 = smul.u32 2, %s30
          %p275 = scmp.lt.s32.totalorder %s29, 1
          %s276 = scalar_select %p275, %s29, 1
          %p277 = scmp.lt.s32.totalorder %s274, 1
          %s278 = scalar_select %p277, %s274, 1
          %s279 = smul.addr %s276, 2
          %s280 = sadd.s32 %s278, %s279
          %s281 = smul.addr %s280, 8
          %s282 = scalar_lea.vmem %s0, %s281
          %s283 = smul.u32 2, %s30
        $region36: #{tpu_custom_call.1} parent=31 // pred_fallthru
          _
        // Predicated region
        $region37: #{tpu_custom_call.1} parent=31 // pred_check
          %p284 = pneg %p84
        $region38: #{tpu_custom_call.1} parent=31 // pred_check_branch
          %286 = sbr.rel (%p284) target = $region40
        $region39: #{tpu_custom_call.1} parent=31 // pred_region
          %s287 = sand.u32 %s74, 1
          %s288 = scalar_lea.sflag [#allocation4], %s287
          %s289 = sand.u32 %s74, 1
          %s290 = smul.addr %s289, 8
          %s291 = scalar_lea.vmem [#allocation3], %s290
          %s293 = ssub.s32 128, 128
          %294 = vsyncadd %s288, %s293
          %s295 = sadd.s32 %s30, %s29
          %s296 = smul.addr %s295, 128
          %s297 = scalar_lea.hbm %s1, %s296
          %s299 = sshll.u32 %s291, 4
          %s300 = int_to_ptr.vmem [resolvable:$true] %s299
          %302 = dma.hbm_to_vmem [thread:$0]  %s297, 128, %s300, %s288
        $region40: #{tpu_custom_call.1} parent=31 // pred_fallthru
          _
        // Predicated region
        $region41: #{tpu_custom_call.1} parent=31 // pred_check
          %p303 = pneg %p112
        $region42: #{tpu_custom_call.1} parent=31 // pred_check_branch
          %305 = sbr.rel (%p303) target = $region44
        $region43: #{tpu_custom_call.1} parent=31 // pred_region
          %s306 = sand.u32 %s22, 1
          %s307 = scalar_lea.sflag [#allocation7], %s306
          %s308 = sand.u32 %s102, 1
          %s309 = smul.addr %s308, 8
          %s310 = scalar_lea.vmem [#allocation6], %s309
          %s312 = ssub.s32 128, 128
          %313 = vsyncadd %s307, %s312
          %s314 = sadd.s32 %s30, %s29
          %s315 = smul.addr %s314, 128
          %s316 = scalar_lea.hbm %s2, %s315
          %s318 = sshll.u32 %s310, 4
          %s319 = int_to_ptr.vmem [resolvable:$true] %s318
          %321 = dma.hbm_to_vmem [thread:$0]  %s316, 128, %s319, %s307
        $region44: #{tpu_custom_call.1} parent=31 // pred_fallthru
          _
      $region32: #{tpu_custom_call.1} parent=5 // pred_fallthru
        _
      %p322 = scmp.le.s32.totalorder 1, %s22
      %p323 = scmp.lt.s32.totalorder %s22, 3
      %p324 = pnand %p322, %p323
      %p325 = pneg %p324
      // Predicated region
      $region45: #{tpu_custom_call.1} parent=5 // pred_check
        _
      $region46: #{tpu_custom_call.1} parent=5 // pred_check_branch
        %327 = sbr.rel (%p324) target = $region48
      $region47: #{tpu_custom_call.1} parent=5 // pred_region
        %s328 = ssub.s32 %s22, 1
        %s329 = sand.u32 %s77, 1
        %s330 = scalar_lea.sflag [#allocation4], %s329
        %s331 = sand.u32 %s77, 1
        %s332 = smul.addr %s331, 8
        %s333 = scalar_lea.vmem [#allocation3], %s332
        // Predicated region
        $region49: #{tpu_custom_call.1} parent=47 // pred_check
          %p334 = pneg %p90
        $region50: #{tpu_custom_call.1} parent=47 // pred_check_branch
          %336 = sbr.rel (%p334) target = $region52
        $region51: #{tpu_custom_call.1} parent=47 // pred_region
          %337 = dma.done %s330, 128
        $region52: #{tpu_custom_call.1} parent=47 // pred_fallthru
          _
        %s338 = sand.u32 %s27, 1
        %s339 = scalar_lea.sflag [#allocation7], %s338
        %s340 = sand.u32 %s105, 1
        %s341 = smul.addr %s340, 8
        %s342 = scalar_lea.vmem [#allocation6], %s341
        // Predicated region
        $region53: #{tpu_custom_call.1} parent=47 // pred_check
          %p343 = pneg %p118
        $region54: #{tpu_custom_call.1} parent=47 // pred_check_branch
          %345 = sbr.rel (%p343) target = $region56
        $region55: #{tpu_custom_call.1} parent=47 // pred_region
          %346 = dma.done %s339, 128
        $region56: #{tpu_custom_call.1} parent=47 // pred_fallthru
          _
        // Predicated region
        $region57: #{tpu_custom_call.1} parent=47 // pred_check
          %p347 = pneg %p139
        $region58: #{tpu_custom_call.1} parent=47 // pred_check_branch
          %349 = sbr.rel (%p347) target = $region60
        $region59: #{tpu_custom_call.1} parent=47 // pred_region
          %350 = dma.done [#allocation7], 512
        $region60: #{tpu_custom_call.1} parent=47 // pred_fallthru
          _
        %s351 = smul.u32 2, %s32
        %p352 = scmp.lt.s32.totalorder %s31, 1
        %s353 = scalar_select %p352, %s31, 1
        %p354 = scmp.lt.s32.totalorder %s351, 1
        %s355 = scalar_select %p354, %s351, 1
        %s356 = smul.addr %s353, 2
        %s357 = sadd.s32 %s355, %s356
        %s358 = smul.addr %s357, 8
        %s359 = scalar_lea.vmem %s0, %s358
        %p360 = pneg %p62
        %p361 = pneg %p59
        %s362 = sand.u32 %s77, 1
        %s363 = scalar_lea.sflag [#allocation4], %s362
        %s364 = sand.u32 %s77, 1
        %s365 = smul.addr %s364, 8
        %s366 = scalar_lea.vmem [#allocation3], %s365
        %p367 = pneg %p90
        %p368 = pneg %p87
        %s369 = sand.u32 %s27, 1
        %s370 = scalar_lea.sflag [#allocation7], %s369
        %s371 = sand.u32 %s105, 1
        %s372 = smul.addr %s371, 8
        %s373 = scalar_lea.vmem [#allocation6], %s372
        %p374 = pneg %p118
        %p375 = pneg %p115
        %p376 = pneg %p139
        %p377 = pneg %p136
        %p378 = pneg %p160
        %p379 = pneg %p157
        %p380 = pneg %p181
        %p381 = pneg %p178
        %p382 = pneg %p202
        %p383 = pneg %p199
        %p384 = pneg %p230
        %p385 = pneg %p227
        %s386 = sand.u32 %s217, 1
        %s387 = scalar_lea.sflag [#allocation5], %s386
        %s388 = sand.u32 %s217, 1
        %s389 = smul.addr %s388, 16
        %s390 = scalar_lea.vmem [#allocation9], %s389
        %s391 = smul.u32 2, %s32
        %p392 = scmp.lt.s32.totalorder %s31, 1
        %s393 = scalar_select %p392, %s31, 1
        %p394 = scmp.lt.s32.totalorder %s391, 1
        %s395 = scalar_select %p394, %s391, 1
        %s396 = smul.addr %s393, 2
        %s397 = sadd.s32 %s395, %s396
        %s398 = smul.addr %s397, 8
        %s399 = scalar_lea.vmem %s0, %s398
        %s400 = smul.u32 2, %s32
        %s401 = smul.u32 2, %s32
        %v402 = vld [vmem:[%s333] sm:$0xff]
        %v403 = vld [vmem:[%s399] sm:$0xff]
        %v404 = vld [vmem:[%s399 + $0x8] sm:$0xff]
        %v405 = vld [vmem:[%s342] sm:$0xff]
        %408 = vrot.lane.b32.xlu0 %v403, 16
        %v409 = vpop.permute.xlu0 %408
        %410 = vrot.lane.b32.xlu0 %v404, 16
        %v411 = vpop.permute.xlu0 %410
        %vm412 = vcmask 130048
        %v413 = vsel %vm412, %v409, %v411
        %418 = vrot.lane.b32.xlu0 %v405, 16
        %v419 = vpop.permute.xlu0 %418
        %v421 = vsel %vm412, %v402, %v409
        %v422 = vsel %vm412, %v411, %v419
        %v423 = vlaneseq
        %v424 = vand.u32 %v423, 127
        %v425 = vadd.s32 %v424, 128
        %v426 = vadd.s32 %v424, 256
        %vm427 = vcmp.lt.s32.totalorder %v424, 0
        %v428 = vsub.s32 0, %v424
        %v429 = vsel %vm427, %v428, %v424
        %v430 = vshrl.u32 %v429, 4
        %v431 = vand.u32 %v429, 15
        %v432 = vsub.s32 0, %v431
        %v433 = vsel %vm427, %v432, %v431
        %vm434 = vcmp.lt.s32.totalorder %v425, 0
        %v435 = vsub.s32 0, %v425
        %v436 = vsel %vm434, %v435, %v425
        %v437 = vshrl.u32 %v436, 4
        %v438 = vand.u32 %v436, 15
        %v439 = vsub.s32 0, %v438
        %v440 = vsel %vm434, %v439, %v438
        %vm441 = vcmp.lt.s32.totalorder %v426, 0
        %v442 = vsub.s32 0, %v426
        %v443 = vsel %vm441, %v442, %v426
        %v444 = vshrl.u32 %v443, 4
        %v445 = vand.u32 %v443, 15
        %v446 = vsub.s32 0, %v445
        %v447 = vsel %vm441, %v446, %v445
        %vm448 = vcmp.ne.s32.totalorder %v433, 0
        %vm449 = vcmp.ne.s32.totalorder %v440, 0
        %vm450 = vcmp.ne.s32.totalorder %v447, 0
        %vm451 = vcmp.lt.s32.totalorder %v433, 0
        %vm452 = vcmp.lt.s32.totalorder %v440, 0
        %vm453 = vcmp.lt.s32.totalorder %v447, 0
        %vm454 = vmand %vm451, %vm448
        %vm455 = vmand %vm452, %vm449
        %vm456 = vmand %vm453, %vm450
        %v457 = vadd.s32 %v433, 16
        %v458 = vadd.s32 %v440, 16
        %v459 = vadd.s32 %v447, 16
        %v460 = vsel %vm454, %v457, %v433
        %v461 = vsel %vm455, %v458, %v440
        %v462 = vsel %vm456, %v459, %v447
        %vm463 = vcmp.ge.s32.totalorder %v460, 1
        %vm464 = vcmp.ge.s32.totalorder %v461, 1
        %vm465 = vcmp.ge.s32.totalorder %v462, 1
        %v466 = vsel %vm463, 1, 0
        %v467 = vsel %vm464, 1, 0
        %v468 = vsel %vm465, 1, 0
        %v469 = vcvt.s32.f32 %v466
        %v470 = vcvt.s32.f32 %v467
        %v471 = vcvt.s32.f32 %v468
        %vm472 = vcmp.le.s32.totalorder %v460, 14
        %vm473 = vcmp.le.s32.totalorder %v461, 14
        %vm474 = vcmp.le.s32.totalorder %v462, 14
        %v475 = vsel %vm472, 1, 0
        %v476 = vsel %vm473, 1, 0
        %v477 = vsel %vm474, 1, 0
        %v478 = vcvt.s32.f32 %v475
        %v479 = vcvt.s32.f32 %v476
        %v480 = vcvt.s32.f32 %v477
        %483 = vrot.lane.b32.xlu0 %v421, 1
        %v484 = vpop.permute.xlu0 %483
        %485 = vrot.lane.b32.xlu0 %v413, 1
        %v486 = vpop.permute.xlu0 %485
        %487 = vrot.lane.b32.xlu0 %v422, 1
        %v488 = vpop.permute.xlu0 %487
        %vm489 = vcmask 7168
        %v490 = vsel %vm489, %v484, %v486
        %v491 = vsel %vm489, %v486, %v488
        %v495 = vsel %vm489, 0.0, %v484
        %v496 = vmul.f32 %v495, %v469
        %v497 = vmul.f32 %v490, %v470
        %v498 = vmul.f32 %v491, %v471
        %499 = vrot.lane.b32.xlu0 %v421, 127
        %v500 = vpop.permute.xlu0 %499
        %501 = vrot.lane.b32.xlu0 %v413, 127
        %v502 = vpop.permute.xlu0 %501
        %503 = vrot.lane.b32.xlu0 %v422, 127
        %v504 = vpop.permute.xlu0 %503
        %vm505 = vcmask 1039360
        %v506 = vsel %vm505, %v500, %v502
        %v507 = vsel %vm505, %v502, %v504
        %vm511 = vcmask 252928
        %v512 = vsel %vm511, %v504, 0.0
        %v513 = vmul.f32 %v506, %v478
        %v514 = vmul.f32 %v507, %v479
        %v515 = vmul.f32 %v512, %v480
        %516 = vst [vmem:[#allocation2] sm:$0xff] %v496
        %517 = vst [vmem:[#allocation2 + $0x8] sm:$0xff] %v497
        %518 = vst [vmem:[#allocation2 + $0x10] sm:$0xff] %v421
        %519 = vst [vmem:[#allocation2 + $0x18] sm:$0xff] %v413
        %520 = vst [vmem:[#allocation2 + $0x20] sm:$0xff] %v513
        %521 = vst [vmem:[#allocation2 + $0x28] sm:$0xff] %v514
        %525 = vrot.lane.b32.xlu0 %v496, 112
        %v526 = vpop.permute.xlu0 %525
        %527 = vrot.lane.b32.xlu0 %v497, 112
        %v528 = vpop.permute.xlu0 %527
        %529 = vrot.lane.b32.xlu0 %v498, 112
        %v530 = vpop.permute.xlu0 %529
        %vm531 = vcmask 916480
        %v532 = vsel %vm531, %v526, %v528
        %v533 = vsel %vm531, %v528, %v530
        %536 = vst [vmem:[#allocation2 + $0x30] sm:$0xff] %v532
        %537 = vst [vmem:[#allocation2 + $0x38] sm:$0xff] %v533
        %538 = vrot.lane.b32.xlu0 %v421, 112
        %v539 = vpop.permute.xlu0 %538
        %540 = vrot.lane.b32.xlu0 %v413, 112
        %v541 = vpop.permute.xlu0 %540
        %542 = vrot.lane.b32.xlu0 %v422, 112
        %v543 = vpop.permute.xlu0 %542
        %v544 = vsel %vm531, %v539, %v541
        %v545 = vsel %vm531, %v541, %v543
        %548 = vst [vmem:[#allocation2 + $0x40] sm:$0xff] %v544
        %549 = vst [vmem:[#allocation2 + $0x48] sm:$0xff] %v545
        %553 = vrot.lane.b32.xlu0 %v513, 112
        %v554 = vpop.permute.xlu0 %553
        %555 = vrot.lane.b32.xlu0 %v514, 112
        %v556 = vpop.permute.xlu0 %555
        %557 = vrot.lane.b32.xlu0 %v515, 112
        %v558 = vpop.permute.xlu0 %557
        %v559 = vsel %vm531, %v554, %v556
        %v560 = vsel %vm531, %v556, %v558
        %563 = vst [vmem:[#allocation2 + $0x50] sm:$0xff] %v559
        %564 = vst [vmem:[#allocation2 + $0x58] sm:$0xff] %v560
        %565 = vrot.lane.b32.xlu0 %v496, 96
        %v566 = vpop.permute.xlu0 %565
        %567 = vrot.lane.b32.xlu0 %v497, 96
        %v568 = vpop.permute.xlu0 %567
        %569 = vrot.lane.b32.xlu0 %v498, 96
        %v570 = vpop.permute.xlu0 %569
        %vm571 = vcmask 785408
        %v572 = vsel %vm571, %v566, %v568
        %v573 = vsel %vm571, %v568, %v570
        %576 = vst [vmem:[#allocation2 + $0x60] sm:$0xff] %v572
        %577 = vst [vmem:[#allocation2 + $0x68] sm:$0xff] %v573
        %578 = vrot.lane.b32.xlu0 %v421, 96
        %v579 = vpop.permute.xlu0 %578
        %580 = vrot.lane.b32.xlu0 %v413, 96
        %v581 = vpop.permute.xlu0 %580
        %582 = vrot.lane.b32.xlu0 %v422, 96
        %v583 = vpop.permute.xlu0 %582
        %v584 = vsel %vm571, %v579, %v581
        %v585 = vsel %vm571, %v581, %v583
        %588 = vst [vmem:[#allocation2 + $0x70] sm:$0xff] %v584
        %589 = vst [vmem:[#allocation2 + $0x78] sm:$0xff] %v585
        %590 = vrot.lane.b32.xlu0 %v513, 96
        %v591 = vpop.permute.xlu0 %590
        %592 = vrot.lane.b32.xlu0 %v514, 96
        %v593 = vpop.permute.xlu0 %592
        %594 = vrot.lane.b32.xlu0 %v515, 96
        %v595 = vpop.permute.xlu0 %594
        %v596 = vsel %vm571, %v591, %v593
        %v597 = vsel %vm571, %v593, %v595
        %600 = vst [vmem:[#allocation2 + $0x80] sm:$0xff] %v596
        %601 = vst [vmem:[#allocation2 + $0x88] sm:$0xff] %v597
        %v602 = vld [vmem:[#allocation8] sm:$0xff]
        %v603 = vld [vmem:[#allocation8 + $0x8] sm:$0xff]
        %v604 = vld [vmem:[#allocation8 + $0x10] sm:$0xff]
        %v605 = vld [vmem:[#allocation8 + $0x18] sm:$0xff]
        %v606 = vld [vmem:[#allocation2] sm:$0xff]
        %v607 = vld [vmem:[#allocation2 + $0x8] sm:$0xff]
        %v608 = vld [vmem:[#allocation2 + $0x10] sm:$0xff]
        %v609 = vld [vmem:[#allocation2 + $0x18] sm:$0xff]
        %v610 = vld [vmem:[#allocation2 + $0x20] sm:$0xff]
        %v611 = vld [vmem:[#allocation2 + $0x28] sm:$0xff]
        %v612 = vld [vmem:[#allocation2 + $0x30] sm:$0xff]
        %v613 = vld [vmem:[#allocation2 + $0x38] sm:$0xff]
        %v614 = vld [vmem:[#allocation2 + $0x40] sm:$0xff]
        %v615 = vld [vmem:[#allocation2 + $0x48] sm:$0xff]
        %v616 = vld [vmem:[#allocation2 + $0x50] sm:$0xff]
        %v617 = vld [vmem:[#allocation2 + $0x58] sm:$0xff]
        %v618 = vld [vmem:[#allocation2 + $0x60] sm:$0xff]
        %v619 = vld [vmem:[#allocation2 + $0x68] sm:$0xff]
        %v620 = vld [vmem:[#allocation2 + $0x70] sm:$0xff]
        %v621 = vld [vmem:[#allocation2 + $0x78] sm:$0xff]
        %v622 = vld [vmem:[#allocation2 + $0x80] sm:$0xff]
        %v623 = vld [vmem:[#allocation2 + $0x88] sm:$0xff]
        %v624 = vld [vmem:[%s4] sm:$0xff]
        %v625 = vld [vmem:[%s4 + $0x8] sm:$0xff]
        %v626 = vld [vmem:[%s4 + $0x10] sm:$0xff]
        %v627 = vld [vmem:[%s4 + $0x18] sm:$0xff]
        %629 = vset.pattern.permute.xlu0 0
        %630 = vperm.xlu0 %629, %v624
        %v631 = vpop.permute.xlu0 %630
        %634 = vset.pattern.permute.xlu0 0
        %635 = vperm.xlu0 %634, %v625
        %v636 = vpop.permute.xlu0 %635
        %639 = vset.pattern.permute.xlu0 0
        %640 = vperm.xlu0 %639, %v626
        %v641 = vpop.permute.xlu0 %640
        %644 = vset.pattern.permute.xlu0 0
        %645 = vperm.xlu0 %644, %v627
        %v646 = vpop.permute.xlu0 %645
        %vm648 = vcmask 588800
        %v650 = vsel %vm648, %v602, 0
        %v653 = vsel %vm648, %v603, 0
        %v656 = vsel %vm648, %v604, 0
        %v659 = vsel %vm648, %v605, 0
        %661 = vmatprep.subr.mxu0 0.0
        %662 = vmatpush1.msra.mxu0 0.0
        %663 = vmatprep.subr.mxu0 0.0
        %664 = vmatpush1.msra.mxu0 0.0
        %665 = vmatprep.subr.mxu0 0.0
        %666 = vmatpush1.msra.mxu0 0.0
        %667 = vmatprep.subr.mxu0 0.0
        %668 = vmatpush1.msra.mxu0 0.0
        %669 = vmatprep.subr.mxu0 0.0
        %670 = vmatpush1.msra.mxu0 0.0
        %671 = vmatprep.subr.mxu0 0.0
        %672 = vmatpush1.msra.mxu0 0.0
        %673 = vmatprep.subr.mxu0 0.0
        %674 = vmatpush1.msra.mxu0 0.0
        %675 = vmatprep.subr.mxu0 %v623
        %676 = vmatpush1.msra.mxu0 %v622
        %677 = vmatprep.subr.mxu0 %v621
        %678 = vmatpush1.msra.mxu0 %v620
        %679 = vmatprep.subr.mxu0 %v619
        %680 = vmatpush1.msra.mxu0 %v618
        %681 = vmatprep.subr.mxu0 %v617
        %682 = vmatpush1.msra.mxu0 %v616
        %683 = vmatprep.subr.mxu0 %v615
        %684 = vmatpush1.msra.mxu0 %v614
        %685 = vmatprep.subr.mxu0 %v613
        %686 = vmatpush1.msra.mxu0 %v612
        %687 = vmatprep.subr.mxu0 %v611
        %688 = vmatpush1.msra.mxu0 %v610
        %689 = vmatprep.subr.mxu0 %v609
        %690 = vmatpush1.msra.mxu0 %v608
        %691 = vmatprep.subr.mxu0 %v607
        %692 = vmatpush1.msra.mxu0 %v606
        %693 = vmatprep.subr.mxu0 0.0
        %694 = vmatpush2.msra.mxu0 0.0
        %695 = vmatprep.subr.mxu0 0.0
        %696 = vmatpush2.msra.mxu0 0.0
        %697 = vmatprep.subr.mxu0 0.0
        %698 = vmatpush2.msra.mxu0 0.0
        %699 = vmatprep.subr.mxu0 0.0
        %700 = vmatpush2.msra.mxu0 0.0
        %701 = vmatprep.subr.mxu0 0.0
        %702 = vmatpush2.msra.mxu0 0.0
        %703 = vmatprep.subr.mxu0 0.0
        %704 = vmatpush2.msra.mxu0 0.0
        %705 = vmatprep.subr.mxu0 0.0
        %706 = vmatpush2.msra.mxu0 0.0
        %707 = vmatprep.subr.mxu0 0.0
        %708 = vmatpush2.msra.mxu0 0.0
        %709 = vmatprep.subr.mxu0 0.0
        %710 = vmatpush2.msra.mxu0 0.0
        %711 = vmatprep.subr.mxu0 0.0
        %712 = vmatpush2.msra.mxu0 0.0
        %713 = vmatprep.subr.mxu0 0.0
        %714 = vmatpush2.msra.mxu0 0.0
        %715 = vmatprep.subr.mxu0 0.0
        %716 = vmatpush2.msra.mxu0 0.0
        %717 = vmatprep.subr.mxu0 0.0
        %718 = vmatpush2.msra.mxu0 0.0
        %719 = vmatprep.subr.mxu0 0.0
        %720 = vmatpush2.msra.mxu0 0.0
        %721 = vmatprep.subr.mxu0 0.0
        %722 = vmatpush2.msra.mxu0 0.0
        %723 = vmatprep.subr.mxu0 0.0
        %724 = vmatpush2.msra.mxu0 0.0
        %725 = vmatprep.mubr.f32.mxu0 0.0
        %726 = vmatmul.mubr.f32.gmra.mxu0 %v650
        %v727 = vpop.f32.mrf.mxu0
        %v728 = vadd.f32 %v631, %v727
        %v729 = vpop.f32.mrf.mxu0
        %v730 = vadd.f32 %v631, %v729
        %731 = vmatprep.mubr.f32.mxu0 0.0
        %732 = vmatmul.mubr.f32.gmra.mxu0 %v653
        %v733 = vpop.f32.mrf.mxu0
        %v734 = vadd.f32 %v636, %v733
        %v735 = vpop.f32.mrf.mxu0
        %v736 = vadd.f32 %v636, %v735
        %737 = vmatprep.mubr.f32.mxu0 0.0
        %738 = vmatmul.mubr.f32.gmra.mxu0 %v656
        %v739 = vpop.f32.mrf.mxu0
        %v740 = vadd.f32 %v641, %v739
        %v741 = vpop.f32.mrf.mxu0
        %v742 = vadd.f32 %v641, %v741
        %743 = vmatprep.mubr.f32.mxu0 0.0
        %744 = vmatmul.mubr.f32.gmra.mxu0 %v659
        %v745 = vpop.f32.mrf.mxu0
        %v746 = vadd.f32 %v646, %v745
        %v747 = vpop.f32.mrf.mxu0
        %v748 = vadd.f32 %v646, %v747
        %749 = vdwg.mxu0
        %v750 = vmax.f32 %v728, 0.0
        %v751 = vmax.f32 %v730, 0.0
        %v752 = vmax.f32 %v734, 0.0
        %v753 = vmax.f32 %v736, 0.0
        %v754 = vmax.f32 %v740, 0.0
        %v755 = vmax.f32 %v742, 0.0
        %v756 = vmax.f32 %v746, 0.0
        %v757 = vmax.f32 %v748, 0.0
        %v758 = vld [vmem:[%s5] sm:$0xff]
        %v759 = vld [vmem:[%s6] sm:$0xff]
        %761 = vset.pattern.permute.xlu0 0
        %762 = vperm.xlu0 %761, %v759
        %v763 = vpop.permute.xlu0 %762
        %vm765 = vcmask 261120
        %v767 = vsel %vm765, %v758, 0
        %769 = vmatprep.subr.mxu0 0.0
        %770 = vmatpush1.msra.mxu0 0.0
        %771 = vmatprep.subr.mxu0 0.0
        %772 = vmatpush1.msra.mxu0 0.0
        %773 = vmatprep.subr.mxu0 0.0
        %774 = vmatpush1.msra.mxu0 0.0
        %775 = vmatprep.subr.mxu0 0.0
        %776 = vmatpush1.msra.mxu0 0.0
        %777 = vmatprep.subr.mxu0 0.0
        %778 = vmatpush1.msra.mxu0 0.0
        %779 = vmatprep.subr.mxu0 0.0
        %780 = vmatpush1.msra.mxu0 0.0
        %781 = vmatprep.subr.mxu0 0.0
        %782 = vmatpush1.msra.mxu0 0.0
        %783 = vmatprep.subr.mxu0 0.0
        %784 = vmatpush1.msra.mxu0 0.0
        %785 = vmatprep.subr.mxu0 0.0
        %786 = vmatpush1.msra.mxu0 0.0
        %787 = vmatprep.subr.mxu0 0.0
        %788 = vmatpush1.msra.mxu0 0.0
        %789 = vmatprep.subr.mxu0 0.0
        %790 = vmatpush1.msra.mxu0 0.0
        %791 = vmatprep.subr.mxu0 0.0
        %792 = vmatpush1.msra.mxu0 0.0
        %793 = vmatprep.subr.mxu0 %v757
        %794 = vmatpush1.msra.mxu0 %v756
        %795 = vmatprep.subr.mxu0 %v755
        %796 = vmatpush1.msra.mxu0 %v754
        %797 = vmatprep.subr.mxu0 %v753
        %798 = vmatpush1.msra.mxu0 %v752
        %799 = vmatprep.subr.mxu0 %v751
        %800 = vmatpush1.msra.mxu0 %v750
        %801 = vmatprep.subr.mxu0 0.0
        %802 = vmatpush2.msra.mxu0 0.0
        %803 = vmatprep.subr.mxu0 0.0
        %804 = vmatpush2.msra.mxu0 0.0
        %805 = vmatprep.subr.mxu0 0.0
        %806 = vmatpush2.msra.mxu0 0.0
        %807 = vmatprep.subr.mxu0 0.0
        %808 = vmatpush2.msra.mxu0 0.0
        %809 = vmatprep.subr.mxu0 0.0
        %810 = vmatpush2.msra.mxu0 0.0
        %811 = vmatprep.subr.mxu0 0.0
        %812 = vmatpush2.msra.mxu0 0.0
        %813 = vmatprep.subr.mxu0 0.0
        %814 = vmatpush2.msra.mxu0 0.0
        %815 = vmatprep.subr.mxu0 0.0
        %816 = vmatpush2.msra.mxu0 0.0
        %817 = vmatprep.subr.mxu0 0.0
        %818 = vmatpush2.msra.mxu0 0.0
        %819 = vmatprep.subr.mxu0 0.0
        %820 = vmatpush2.msra.mxu0 0.0
        %821 = vmatprep.subr.mxu0 0.0
        %822 = vmatpush2.msra.mxu0 0.0
        %823 = vmatprep.subr.mxu0 0.0
        %824 = vmatpush2.msra.mxu0 0.0
        %825 = vmatprep.subr.mxu0 0.0
        %826 = vmatpush2.msra.mxu0 0.0
        %827 = vmatprep.subr.mxu0 0.0
        %828 = vmatpush2.msra.mxu0 0.0
        %829 = vmatprep.subr.mxu0 0.0
        %830 = vmatpush2.msra.mxu0 0.0
        %831 = vmatprep.subr.mxu0 0.0
        %832 = vmatpush2.msra.mxu0 0.0
        %833 = vmatprep.mubr.f32.mxu0 0.0
        %834 = vmatmul.mubr.f32.gmra.mxu0 %v767
        %v835 = vpop.f32.mrf.mxu0
        %v836 = vadd.f32 %v763, %v835
        %v837 = vpop.f32.mrf.mxu0
        %v838 = vadd.f32 %v763, %v837
        %839 = vdwg.mxu0
        %840 = vst [vmem:[%s390] sm:$0xff] %v836
        %841 = vst [vmem:[%s390 + $0x8] sm:$0xff] %v838
        %s842 = sand.u32 %s217, 1
        %s843 = scalar_lea.sflag [#allocation5], %s842
        %s844 = sand.u32 %s217, 1
        %s845 = smul.addr %s844, 16
        %s846 = scalar_lea.vmem [#allocation9], %s845
        // Predicated region
        $region61: #{tpu_custom_call.1} parent=47 // pred_check
          %p847 = pneg %p227
        $region62: #{tpu_custom_call.1} parent=47 // pred_check_branch
          %849 = sbr.rel (%p847) target = $region64
        $region63: #{tpu_custom_call.1} parent=47 // pred_region
          %s850 = smul.u32 2, %s32
          %s852 = ssub.s32 256, 256
          %853 = vsyncadd %s843, %s852
          %s854 = smul.addr %s31, 2
          %s855 = sadd.s32 %s850, %s854
          %s856 = smul.addr %s855, 128
          %s857 = scalar_lea.hbm %s7, %s856
          %s859 = sshll.u32 %s846, 4
          %s860 = int_to_ptr.vmem [resolvable:$true] %s859
          %862 = dma.vmem_to_hbm [thread:$0]  %s860, 256, %s857, %s843
        $region64: #{tpu_custom_call.1} parent=47 // pred_fallthru
          _
      $region48: #{tpu_custom_call.1} parent=5 // pred_fallthru
        _
      %p863 = scmp.le.s32.totalorder 2, %s22
      // Predicated region
      $region65: #{tpu_custom_call.1} parent=5 // pred_check
        %p864 = pneg %p863
      $region66: #{tpu_custom_call.1} parent=5 // pred_check_branch
        %866 = sbr.rel (%p864) target = $region68
      $region67: #{tpu_custom_call.1} parent=5 // pred_region
        %s867 = ssub.s32 %s22, 2
        // Predicated region
        $region69: #{tpu_custom_call.1} parent=67 // pred_check
          %p868 = pneg %p233
        $region70: #{tpu_custom_call.1} parent=67 // pred_check_branch
          %870 = sbr.rel (%p868) target = $region72
        $region71: #{tpu_custom_call.1} parent=67 // pred_region
          %s871 = sand.u32 %s218, 1
          %s872 = scalar_lea.sflag [#allocation5], %s871
          %s873 = sand.u32 %s218, 1
          %s874 = smul.addr %s873, 16
          %s875 = scalar_lea.vmem [#allocation9], %s874
          %876 = dma.done %s872, 256
        $region72: #{tpu_custom_call.1} parent=67 // pred_fallthru
          _
      $region68: #{tpu_custom_call.1} parent=5 // pred_fallthru
        _
    $region6: #{tpu_custom_call.1} parent=1 // loop_footer
      %s26 = sadd.s32 1, %s22
    $region7: #{tpu_custom_call.1} parent=1 // loop_footer_branch
      %21 = sbr.rel target = $region3
    $region8: #{tpu_custom_call.1} parent=1 // loop_exit
      _
    %877 = vsyncpa [#allocation4], 1
    %s878 = scalar_lea.sflag [#allocation4], 1
    %879 = vsyncpa %s878, 1
    %880 = vsyncpa [#allocation7], 1
    %s881 = scalar_lea.sflag [#allocation7], 1
    %882 = vsyncpa %s881, 1
    %883 = vsyncpa [#allocation5], 1
    %s884 = scalar_lea.sflag [#allocation5], 1
    %885 = vsyncpa %s884, 1

</llo_original>
